<compile_context>
chip_gen: v6e
topology: v6e:2x2x1
jax: 0.10.0
libtpu: 0.0.40
codegen_flags: <defaults>
</compile_context>

<pallas_src>
import functools

import jax
import jax.numpy as jnp
from jax import lax
from jax.experimental import pallas as pl
from jax.experimental.pallas import tpu as pltpu


def _round_up(x, m):
    return ((x + m - 1) // m) * m


# ----------------------------------------------------------------------------
# Pallas kernels
# ----------------------------------------------------------------------------
def _mm_fused_kernel(*refs, act, res_act, has_res):
    """out = res_act( act(A @ B + shift) [+ residual] ).

    A/B arrive bf16 (MXU), accumulation + epilogue in f32, store in o_ref.dtype.
    Grid axis 1 tiles K; the f32 accumulator lives in VMEM scratch."""
    if has_res:
        a_ref, w_ref, c_ref, r_ref, o_ref, acc_ref = refs
    else:
        a_ref, w_ref, c_ref, o_ref, acc_ref = refs
        r_ref = None
    k = pl.program_id(1)

    @pl.when(k == 0)
    def _():
        acc_ref[...] = jnp.zeros_like(acc_ref)

    acc_ref[...] += jnp.dot(a_ref[...], w_ref[...],
                            preferred_element_type=jnp.float32)

    @pl.when(k == pl.num_programs(1) - 1)
    def _():
        out = acc_ref[...] + c_ref[...]
        if act == "relu":
            out = jnp.maximum(out, 0.0)
        if has_res:
            out = out + r_ref[...].astype(jnp.float32)
        if res_act == "relu":
            out = jnp.maximum(out, 0.0)
        o_ref[...] = out.astype(o_ref.dtype)


def matmul_fused(a, w, shift, residual=None, act="none", res_act="none",
                 out_dtype=jnp.bfloat16, tm_max=512):
    """a: (M, K), w: (K, N) (BN scale already folded in), shift: (N,) f32,
    residual: optional (M, N).  Returns (M, N) out_dtype."""
    M, K = a.shape
    K2, N = w.shape
    assert K == K2

    a = a.astype(jnp.bfloat16)          # no-op when activations are already bf16
    w = w.astype(jnp.bfloat16)          # weights: trace-time cast
    shift = shift.reshape(1, N).astype(jnp.float32)

    # --- K tiling: only when K is very wide (bounds VMEM on v7x's 64 MiB) ----
    tk = K
    if K > 4096:
        for cand in (2048, 1024, 512):
            if K % cand == 0:
                tk = cand
                break
    nk = K // tk

    # --- M tiling: biggest tile (<= tm_max) with small padding waste ---------
    Mp = _round_up(M, 8)
    tm = 8
    for cand in (1024, 512, 256, 128, 64, 32, 16, 8):
        if cand <= tm_max and cand <= Mp:
            if _round_up(Mp, cand) - Mp <= max(Mp // 8, 7):
                tm = cand
                break
    Mp = _round_up(Mp, tm)
    nm = Mp // tm

    if Mp != M:
        a = jnp.pad(a, ((0, Mp - M), (0, 0)))

    has_res = residual is not None
    inputs = [a, w, shift]
    in_specs = [
        pl.BlockSpec((tm, tk), lambda i, k: (i, k)),
        pl.BlockSpec((tk, N), lambda i, k: (k, 0)),
        pl.BlockSpec((1, N), lambda i, k: (0, 0)),
    ]
    if has_res:
        r = residual.astype(jnp.bfloat16)
        if Mp != M:
            r = jnp.pad(r, ((0, Mp - M), (0, 0)))
        inputs.append(r)
        in_specs.append(pl.BlockSpec((tm, N), lambda i, k: (i, 0)))

    out_isz = 4 if out_dtype == jnp.float32 else 2
    # Explicit VMEM budget: double-buffered A/W/shift/residual/out + accumulator.
    est = (2 * tm * tk * 2 + 2 * tk * N * 2 + 2 * N * 4
           + (2 * tm * N * 2 if has_res else 0)
           + 2 * tm * N * out_isz + tm * N * 4)
    vmem_limit = int(min(max(2 * est + (2 << 20), 32 * 1024 * 1024),
                         48 * 1024 * 1024))

    out = pl.pallas_call(
        functools.partial(_mm_fused_kernel, act=act, res_act=res_act,
                          has_res=has_res),
        out_shape=jax.ShapeDtypeStruct((Mp, N), out_dtype),
        grid=(nm, nk),
        in_specs=in_specs,
        out_specs=pl.BlockSpec((tm, N), lambda i, k: (i, 0)),
        scratch_shapes=[pltpu.VMEM((tm, N), jnp.float32)],
        compiler_params=pltpu.CompilerParams(
            dimension_semantics=("parallel", "arbitrary"),
            vmem_limit_bytes=vmem_limit),
    )(*inputs)
    return out if Mp == M else out[:M]


def _attn_kernel(q_ref, k_ref, v_ref, o_ref):
    # One (batch*head) slice per grid step.  q/k arrive bf16 with the softmax
    # scale already folded into the q weights; logits/softmax stay f32.
    q = q_ref[...]
    k = k_ref[...]
    s = jnp.einsum("bqd,bkd->bqk", q, k, preferred_element_type=jnp.float32)
    s = s - jnp.max(s, axis=-1, keepdims=True)
    p = jnp.exp(s)
    p = p * pl.reciprocal(jnp.sum(p, axis=-1, keepdims=True), approx=True)
    v = v_ref[...].astype(jnp.float32)          # L*d cast (smaller than L*L)
    o = jnp.einsum("bqk,bkd->bqd", p, v, preferred_element_type=jnp.float32)
    o_ref[...] = o.astype(o_ref.dtype)


def attention_pallas(q, k, v):
    """q, k, v: (B*heads, L, d) bf16 -> (B*heads, L, d) bf16."""
    # TODO(synk): for large L, add q-block tiling with online softmax (m/l/acc
    # VMEM scratch) so the (L, L) logits never fully materialise.
    BH, L, d = q.shape
    spec = pl.BlockSpec((1, L, d), lambda b: (b, 0, 0))
    return pl.pallas_call(
        _attn_kernel,
        out_shape=jax.ShapeDtypeStruct((BH, L, d), jnp.bfloat16),
        grid=(BH,),
        in_specs=[spec, spec, spec],
        out_specs=pl.BlockSpec((1, L, d), lambda b: (b, 0, 0)),
        compiler_params=pltpu.CompilerParams(
            dimension_semantics=("parallel",)),
    )(q, k, v)


def _gap_kernel(x_ref, o_ref):
    o_ref[...] = jnp.mean(x_ref[...].astype(jnp.float32), axis=1, keepdims=True)


def global_avg_pool(x):
    """AdaptiveAvgPool2d((1,1)) + flatten on NHWC: (B, H, W, C) -> (B, C) f32."""
    # TODO(synk): fuse this spatial mean into the preceding conv epilogue to
    # save one full read of the feature map at large resolutions.
    B, H, W, C = x.shape
    x2 = x.reshape(B, H * W, C)
    out = pl.pallas_call(
        _gap_kernel,
        out_shape=jax.ShapeDtypeStruct((B, 1, C), jnp.float32),
        grid=(B,),
        in_specs=[pl.BlockSpec((1, H * W, C), lambda b: (b, 0, 0))],
        out_specs=pl.BlockSpec((1, 1, C), lambda b: (b, 0, 0)),
        compiler_params=pltpu.CompilerParams(
            dimension_semantics=("parallel",)),
    )(x2)
    return out.reshape(B, C)


# ----------------------------------------------------------------------------
# Conv / linear glue (im2col in JAX, fused matmul in Pallas)
# ----------------------------------------------------------------------------
def im2col_nhwc(x, kh, kw, stride, padding):
    B, H, W, C = x.shape
    Ho = (H + 2 * padding - kh) // stride + 1
    Wo = (W + 2 * padding - kw) // stride + 1
    if kh == 1 and kw == 1 and padding == 0 and stride == 1:
        return x.reshape(B * H * W, C), H, W
    xp = jnp.pad(x, ((0, 0), (padding, padding), (padding, padding), (0, 0)))
    cols = []
    for i in range(kh):
        for j in range(kw):
            cols.append(xp[:, i:i + stride * Ho:stride, j:j + stride * Wo:stride, :])
    # TODO(synk): im2col for k>1 still materializes kh*kw x the activation bytes
    # (now bf16, i.e. half the previous traffic); the proper fix is a tap grid
    # axis in matmul_fused whose index_map gathers shifted windows in-kernel.
    cols = jnp.concatenate(cols, axis=-1)               # (B, Ho, Wo, kh*kw*C)
    return cols.reshape(B * Ho * Wo, kh * kw * C), Ho, Wo


def conv2d(x, w, b=None, stride=1, padding=0, bn=None, act="none",
           residual=None, res_act="none", out_dtype=jnp.bfloat16):
    """PyTorch-layout weights (O, I, kh, kw) on NHWC (bf16) activations.
    Eval-mode BN scale is folded into the weights; bias/BN-shift, activation,
    residual add and post-residual activation run in the Pallas epilogue."""
    B = x.shape[0]
    O, I, kh, kw = w.shape
    cols, Ho, Wo = im2col_nhwc(x, kh, kw, stride, padding)
    w2 = w.transpose(2, 3, 1, 0).reshape(kh * kw * I, O)   # matches im2col order
    bias = b if b is not None else jnp.zeros((O,), jnp.float32)
    if bn is not None:
        gamma, beta, mean, var, eps = bn
        scale = gamma / jnp.sqrt(var + eps)
        shift = beta - mean * scale
        w2 = w2 * scale[None, :]                            # (A@B)*s == A@(B*s)
        total_shift = bias * scale + shift
    else:
        total_shift = bias
    res2 = None if residual is None else residual.reshape(B * Ho * Wo, O)
    out = matmul_fused(cols, w2, total_shift, residual=res2,
                       act=act, res_act=res_act, out_dtype=out_dtype)
    return out.reshape(B, Ho, Wo, O)


def linear(x, w, b, act="none", out_dtype=jnp.bfloat16):
    """x: (M, in), w: (out, in) torch layout."""
    return matmul_fused(x, w.T, b, act=act, out_dtype=out_dtype)


def max_pool(x, k, s, p):
    # TODO(synk): MaxPool2d via lax.reduce_window (no Pallas pooling primitive).
    return lax.reduce_window(
        x, jnp.array(-jnp.inf, x.dtype), lax.max,
        (1, k, k, 1), (1, s, s, 1), ((0, 0), (p, p), (p, p), (0, 0)))


def bilinear_resize(x, h, w):
    # TODO(synk): F.interpolate(bilinear, align_corners=False) via jax.image.resize;
    # folding these resizes into the conv index_map would save 1-2 HBM passes
    # per scale per block at real resolutions.
    B, _, _, C = x.shape
    return jax.image.resize(x, (B, h, w, C), method="bilinear", antialias=False)


# ----------------------------------------------------------------------------
# Parameter initialization (deterministic, mirrors module __init__ shapes)
# ----------------------------------------------------------------------------
class ParamGen:
    def __init__(self, seed=0):
        self._key = jax.random.PRNGKey(seed)

    def normal(self, shape):
        self._key, sub = jax.random.split(self._key)
        return jax.random.normal(sub, shape, dtype=jnp.float32)


def init_conv(pg, o, i, kh, kw, bias=True):
    fan_out = o * kh * kw
    w = pg.normal((o, i, kh, kw)) * jnp.sqrt(2.0 / fan_out)   # kaiming fan_out
    b = jnp.zeros((o,), jnp.float32) if bias else None
    return {"w": w, "b": b}


def init_bn(c):
    return {"gamma": jnp.ones((c,), jnp.float32), "beta": jnp.zeros((c,), jnp.float32),
            "mean": jnp.zeros((c,), jnp.float32), "var": jnp.ones((c,), jnp.float32),
            "eps": 1e-5}


def bn_tuple(bn):
    return (bn["gamma"], bn["beta"], bn["mean"], bn["var"], bn["eps"])


def init_linear(pg, o, i):
    return {"w": pg.normal((o, i)) * 0.01, "b": jnp.zeros((o,), jnp.float32)}


def init_attention(pg, channels, heads, dim_head):
    inner = heads * dim_head
    return {"to_q": init_conv(pg, inner, channels, 1, 1, bias=False),
            "to_k": init_conv(pg, inner, channels, 1, 1, bias=False),
            "to_v": init_conv(pg, inner, channels, 1, 1, bias=False),
            "to_out": init_conv(pg, channels, inner, 1, 1, bias=True),
            "pos_enc": pg.normal((1, channels, 32, 32))}


def init_multiscale(pg, channels, scales=(1, 2, 4)):
    return {"scales": list(scales),
            "convs": [{"conv": init_conv(pg, channels, channels, 3, 3),
                       "bn": init_bn(channels)} for _ in scales],
            "fusion": {"conv": init_conv(pg, channels, channels * len(scales), 1, 1),
                       "bn": init_bn(channels)}}


def init_block(pg, channels, use_attention):
    p = {"type": "block", "use_attention": use_attention,
         "heads": 8, "dim_head": channels // 8,
         "conv1": {"conv": init_conv(pg, channels, channels, 3, 3), "bn": init_bn(channels)},
         "conv2": {"conv": init_conv(pg, channels, channels, 3, 3), "bn": init_bn(channels)},
         "multi_scale": init_multiscale(pg, channels)}
    if use_attention:
        p["attention"] = init_attention(pg, channels, heads=8, dim_head=channels // 8)
    return p


def init_texturenet(pg, num_classes, base_channels, num_blocks, texture_dim):
    params = {"conv1": {"conv": init_conv(pg, base_channels, 3, 7, 7, bias=False),
                        "bn": init_bn(base_channels)}}
    blocks = []
    cur = base_channels
    for i in range(num_blocks):
        out_ch = cur * 2 if (i > 0 and i % 2 == 0) else cur
        if out_ch != cur:
            blocks.append({"type": "transition",
                           "conv": init_conv(pg, out_ch, cur, 1, 1, bias=False),
                           "bn": init_bn(out_ch)})
        blocks.append(init_block(pg, out_ch, use_attention=(i > 0)))
        cur = out_ch
    params["texture_blocks"] = blocks
    params["texture_svd"] = {"dim_reduce": init_conv(pg, texture_dim, cur, 1, 1, bias=True),
                             "projection": init_linear(pg, texture_dim, texture_dim)}
    params["classifier"] = {"fc1": init_linear(pg, 512, cur + texture_dim),
                            "fc2": init_linear(pg, num_classes, 512)}
    return params


# ----------------------------------------------------------------------------
# Forward passes (all activations NHWC bf16)
# ----------------------------------------------------------------------------
def multi_scale_forward(p, x, extra_residual=None, final_act="none"):
    B, H, W, C = x.shape
    outs = []
    for i, scale in enumerate(p["scales"]):
        if scale == 1:
            scaled = x
        else:
            scaled = bilinear_resize(x, int(H / scale), int(W / scale))
        conv = p["convs"][i]
        co = conv2d(scaled, conv["conv"]["w"], conv["conv"]["b"],
                    stride=1, padding=1, bn=bn_tuple(conv["bn"]), act="relu")
        if scale != 1:
            co = bilinear_resize(co, H, W)
        outs.append(co)
    ms = jnp.concatenate(outs, axis=-1)
    # Fuse the module's own residual (+ optional block identity and final ReLU)
    # directly into the fusion-conv epilogue.
    res = x if extra_residual is None else x + extra_residual
    return conv2d(ms, p["fusion"]["conv"]["w"], p["fusion"]["conv"]["b"],
                  stride=1, padding=0, bn=bn_tuple(p["fusion"]["bn"]), act="relu",
                  residual=res, res_act=final_act)


def attention_forward(p, x, heads, dim_head):
    B, H, W, C = x.shape
    pos = p["pos_enc"].transpose(0, 2, 3, 1)          # (1, 32, 32, C) NHWC f32
    pos = bilinear_resize(pos, H, W).astype(x.dtype)
    x = x + pos                                       # broadcast over batch
    inner = heads * dim_head
    # Softmax scale folded into the q projection weights (to_q has no bias).
    wq = p["to_q"]["w"] * (dim_head ** (-0.5))
    q = conv2d(x, wq, None)
    k = conv2d(x, p["to_k"]["w"], None)
    v = conv2d(x, p["to_v"]["w"], None)
    L = H * W

    def to_heads(t):
        return (t.reshape(B, L, heads, dim_head)
                 .transpose(0, 2, 1, 3)
                 .reshape(B * heads, L, dim_head))

    o = attention_pallas(to_heads(q), to_heads(k), to_heads(v))
    o = (o.reshape(B, heads, L, dim_head)
          .transpose(0, 2, 1, 3)
          .reshape(B, H, W, inner))
    # to_out: 1x1 conv + Dropout (identity in eval); residual (x + pos) fused.
    return conv2d(o, p["to_out"]["w"], p["to_out"]["b"],
                  residual=x, res_act="none")


def block_forward(p, x):
    identity = x
    out = conv2d(x, p["conv1"]["conv"]["w"], p["conv1"]["conv"]["b"],
                 stride=1, padding=1, bn=bn_tuple(p["conv1"]["bn"]), act="relu")
    out = conv2d(out, p["conv2"]["conv"]["w"], p["conv2"]["conv"]["b"],
                 stride=1, padding=1, bn=bn_tuple(p["conv2"]["bn"]), act="none")
    if p["use_attention"]:
        out = attention_forward(p["attention"], out, p["heads"], p["dim_head"])
    # block's (+identity, ReLU) is fused into the multi-scale fusion conv epilogue
    return multi_scale_forward(p["multi_scale"], out,
                               extra_residual=identity, final_act="relu")


def svd_extractor_forward(p, x, texture_dim, pooling_size=4):
    B, H, W, _ = x.shape
    x = conv2d(x, p["dim_reduce"]["w"], p["dim_reduce"]["b"])  # (B, H, W, texture_dim)
    c = x.shape[-1]
    num_h = max(H // pooling_size, 1)
    num_w = max(W // pooling_size, 1)
    p_h = H // num_h
    p_w = W // num_w
    patches = x.astype(jnp.float32).reshape(B, num_h, p_h, num_w, p_w, c)
    patches = patches.transpose(0, 1, 3, 5, 2, 4).reshape(B, num_h * num_w, c, p_h * p_w)
    # TODO(synk): torch.svd has no Pallas equivalent; jnp.linalg.svd (plain JAX/XLA).
    u, s, _ = jnp.linalg.svd(patches, full_matrices=False)     # u:(B,P,c,k) s:(B,P,k)
    k = s.shape[-1]
    if k >= texture_dim:
        s_t = s[..., :texture_dim]
        u_t = u[..., :texture_dim]
    else:
        s_t = jnp.concatenate([s, jnp.zeros(s.shape[:-1] + (texture_dim - k,), s.dtype)], axis=-1)
        u_t = jnp.concatenate([u, jnp.zeros(u.shape[:-1] + (texture_dim - k,), u.dtype)], axis=-1)
    weighted = u_t * s_t[..., None, :]                          # (B, P, c, texture_dim)
    patch_feats = weighted.mean(axis=-2)                        # mean over rows
    region = patch_feats.mean(axis=1)                           # mean over patches
    return linear(region, p["projection"]["w"], p["projection"]["b"],
                  act="relu", out_dtype=jnp.float32)


def texturenet_forward(params, x_nchw, texture_dim):
    # NCHW f32 -> NHWC bf16 once; activations stay bf16 in HBM end-to-end.
    x = jnp.transpose(x_nchw, (0, 2, 3, 1)).astype(jnp.bfloat16)
    # stem: conv7x7 s2 (no bias) + BN + ReLU + maxpool3 s2
    x = conv2d(x, params["conv1"]["conv"]["w"], None, stride=2, padding=3,
               bn=bn_tuple(params["conv1"]["bn"]), act="relu")
    x = max_pool(x, 3, 2, 1)
    for blk in params["texture_blocks"]:
        if blk["type"] == "transition":
            x = conv2d(x, blk["conv"]["w"], None, stride=2, padding=0,
                       bn=bn_tuple(blk["bn"]), act="relu")
        else:
            x = block_forward(blk, x)
    global_features = global_avg_pool(x)                        # (B, C) f32
    texture_features = svd_extractor_forward(params["texture_svd"], x, texture_dim)
    combined = jnp.concatenate([global_features, texture_features], axis=1)
    h1 = linear(combined, params["classifier"]["fc1"]["w"],
                params["classifier"]["fc1"]["b"], act="relu")
    # Dropout(0.5) -> identity (eval mode)
    logits = linear(h1, params["classifier"]["fc2"]["w"],
                    params["classifier"]["fc2"]["b"], act="none",
                    out_dtype=jnp.float32)
    return logits, combined


# ----------------------------------------------------------------------------
if __name__ == "__main__":
    NUM_CLASSES = 10
    BASE_CHANNELS = 32
    NUM_BLOCKS = 2
    TEXTURE_DIM = 32
    INPUT_SIZE = 16
    BATCH = 2

    key = jax.random.PRNGKey(0)
    x = jax.random.normal(key, (BATCH, 3, INPUT_SIZE, INPUT_SIZE), dtype=jnp.float32)

    pg = ParamGen(seed=0)
    params = init_texturenet(pg, NUM_CLASSES, BASE_CHANNELS, NUM_BLOCKS, TEXTURE_DIM)

    logits, combined = texturenet_forward(params, x, TEXTURE_DIM)
    jax.block_until_ready((logits, combined))

    assert logits.shape == (BATCH, NUM_CLASSES)
    assert combined.shape == (BATCH, BASE_CHANNELS + TEXTURE_DIM)
    assert bool(jnp.all(jnp.isfinite(logits)))
    assert bool(jnp.all(jnp.isfinite(combined)))
    print("KERNEL_OK")
</pallas_src>

<mosaic_0001>
module attributes {stable_mosaic.version = 11 : i64} {
  func.func @_mm_fused_kernel(%arg0: i32, %arg1: i32, %arg2: memref<128x147xbf16, #tpu.memory_space<vmem>>, %arg3: memref<147x32xbf16, #tpu.memory_space<vmem>>, %arg4: memref<1x32xf32, #tpu.memory_space<vmem>>, %arg5: memref<128x32xbf16, #tpu.memory_space<vmem>>, %arg6: memref<128x32xf32, #tpu.memory_space<vmem>>) attributes {dimension_semantics = [#tpu.dimension_semantics<parallel>, #tpu.dimension_semantics<arbitrary>], iteration_bounds = array<i64: 1, 1>, scalar_prefetch = 0 : i64, scratch_operands = 1 : i64, tpu.core_type = #tpu.core_type<tc>, window_params = [{transform_indices = @transform_0, window_bounds = array<i64: 128, 147>}, {transform_indices = @transform_1, window_bounds = array<i64: 147, 32>}, {pipeline_mode = #tpu.pipeline_mode<synchronous>, transform_indices = @transform_2, window_bounds = array<i64: 1, 32>}, {transform_indices = @transform_3, window_bounds = array<i64: 128, 32>}]} {
    %c0_i32 = arith.constant 0 : i32
    %0 = arith.cmpi eq, %arg1, %c0_i32 : i32
    %1 = arith.extui %0 : i1 to i32
    %c0_i32_0 = arith.constant 0 : i32
    %2 = arith.cmpi ne, %1, %c0_i32_0 : i32
    scf.if %2 {
      %cst_10 = arith.constant 0.000000e+00 : f32
      %12 = vector.broadcast %cst_10 : f32 to vector<128x32xf32>
      %c0_11 = arith.constant 0 : index
      %c0_12 = arith.constant 0 : index
      %13 = vector.load %arg6[%c0_11, %c0_12] : memref<128x32xf32, #tpu.memory_space<vmem>>, vector<128x32xf32>
      tpu.vector_store %arg6[%c0_11, %c0_12], %12 {strides = array<i32>} : memref<128x32xf32, #tpu.memory_space<vmem>>, vector<128x32xf32>,
    } else {
    }
    %c0 = arith.constant 0 : index
    %c0_1 = arith.constant 0 : index
    %3 = vector.load %arg6[%c0, %c0_1] : memref<128x32xf32, #tpu.memory_space<vmem>>, vector<128x32xf32>
    %c0_2 = arith.constant 0 : index
    %c0_3 = arith.constant 0 : index
    %4 = vector.load %arg2[%c0_2, %c0_3] : memref<128x147xbf16, #tpu.memory_space<vmem>>, vector<128x147xbf16>
    %c0_4 = arith.constant 0 : index
    %c0_5 = arith.constant 0 : index
    %5 = vector.load %arg3[%c0_4, %c0_5] : memref<147x32xbf16, #tpu.memory_space<vmem>>, vector<147x32xbf16>
    %cst = arith.constant dense<0.000000e+00> : vector<128x32xf32>
    %6 = tpu.matmul %4, %5, %cst {dimension_numbers = #tpu.dot_dimension_numbers<[1], [0], [0], [1], [0, 0, 1, 1], [], []>} : vector<128x147xbf16>, vector<147x32xbf16>, vector<128x32xf32> -> vector<128x32xf32>
    %7 = arith.addf %3, %6 : vector<128x32xf32>
    %c0_6 = arith.constant 0 : index
    %c0_7 = arith.constant 0 : index
    %8 = vector.load %arg6[%c0_6, %c0_7] : memref<128x32xf32, #tpu.memory_space<vmem>>, vector<128x32xf32>
    tpu.vector_store %arg6[%c0_6, %c0_7], %7 {strides = array<i32>} : memref<128x32xf32, #tpu.memory_space<vmem>>, vector<128x32xf32>,
    %c0_i32_8 = arith.constant 0 : i32
    %9 = arith.cmpi eq, %arg1, %c0_i32_8 : i32
    %10 = arith.extui %9 : i1 to i32
    %c0_i32_9 = arith.constant 0 : i32
    %11 = arith.cmpi ne, %10, %c0_i32_9 : i32
    scf.if %11 {
      %c0_10 = arith.constant 0 : index
      %c0_11 = arith.constant 0 : index
      %12 = vector.load %arg6[%c0_10, %c0_11] : memref<128x32xf32, #tpu.memory_space<vmem>>, vector<128x32xf32>
      %c0_12 = arith.constant 0 : index
      %c0_13 = arith.constant 0 : index
      %13 = vector.load %arg4[%c0_12, %c0_13] : memref<1x32xf32, #tpu.memory_space<vmem>>, vector<1x32xf32>
      %14 = vector.broadcast %13 : vector<1x32xf32> to vector<128x32xf32>
      %15 = arith.addf %12, %14 : vector<128x32xf32>
      %cst_14 = arith.constant 0.000000e+00 : f32
      %16 = vector.broadcast %cst_14 : f32 to vector<128x32xf32>
      %17 = arith.maximumf %15, %16 : vector<128x32xf32>
      %18 = arith.truncf %17 : vector<128x32xf32> to vector<128x32xbf16>
      %c0_15 = arith.constant 0 : index
      %c0_16 = arith.constant 0 : index
      %19 = vector.load %arg5[%c0_15, %c0_16] : memref<128x32xbf16, #tpu.memory_space<vmem>>, vector<128x32xbf16>
      tpu.vector_store %arg5[%c0_15, %c0_16], %18 {strides = array<i32>} : memref<128x32xbf16, #tpu.memory_space<vmem>>, vector<128x32xbf16>,
    } else {
    }
    return
  }
  func.func @transform_0(%arg0: i32, %arg1: i32) -> (i32, i32) {
    %c0_i32 = arith.constant 0 : i32
    return %arg0, %arg1 : i32, i32
  }
  func.func @transform_1(%arg0: i32, %arg1: i32) -> (i32, i32) {
    %c0_i32 = arith.constant 0 : i32
    %c0_i32_0 = arith.constant 0 : i32
    return %arg1, %c0_i32 : i32, i32
  }
  func.func @transform_2(%arg0: i32, %arg1: i32) -> (i32, i32) {
    %c0_i32 = arith.constant 0 : i32
    %c0_i32_0 = arith.constant 0 : i32
    %c0_i32_1 = arith.constant 0 : i32
    return %c0_i32, %c0_i32_0 : i32, i32
  }
  func.func @transform_3(%arg0: i32, %arg1: i32) -> (i32, i32) {
    %c0_i32 = arith.constant 0 : i32
    %c0_i32_0 = arith.constant 0 : i32
    return %arg0, %c0_i32 : i32, i32
  }
}

</mosaic_0001>

<llo_original>
// kernel: tpu_custom_call.1
$region0: #{tpu_custom_call.1}
  #allocation0 [shape = 'u32[]', space=smem, size = 0x4, offset = 0x4, fixed_abs, tag = 'smem constant byte address 0x4 - core index']
  #allocation1 [shape = 'u32[144,128]{1,0:T(1,128)}', space=vmem, size = 0x12000, scoped, tag = 'internal scratch']
  #allocation2 [shape = 'f32[128,32]{1,0:T(8,128)}', space=vmem, size = 0x10000, scoped, tag = 'scratch operand']
  %s0 = inlined_call_operand.vmem [shape: bf16[128,147], index: 0, kind: input, shape index: {}]
  %s1 = inlined_call_operand.vmem [shape: bf16[147,32], index: 1, kind: input, shape index: {}]
  %s2 = inlined_call_operand.vmem [shape: f32[1,32], index: 2, kind: input, shape index: {}]
  %s3 = inlined_call_operand.vmem [shape: bf16[128,32], index: 3, kind: output, shape index: {}]
  %s4 = sld [smem:[#allocation0]]
  $region30: #{tpu_custom_call.1} parent=0
    _
  %s6 = ssub.s32 1, %s4
  %s7 = scalar_select 0, %s6, %s4
  // Predicated region
  $region2: #{tpu_custom_call.1} parent=0 // pred_check
    _
  $region3: #{tpu_custom_call.1} parent=0 // pred_check_branch
    %9 = sbr.rel (0) target = $region5
  $region4: #{tpu_custom_call.1} parent=0 // pred_region
    _
  $region5: #{tpu_custom_call.1} parent=0 // pred_fallthru
    _
  // Predicated region
  $region6: #{tpu_custom_call.1} parent=0 // pred_check
    _
  $region7: #{tpu_custom_call.1} parent=0 // pred_check_branch
    %11 = sbr.rel (0) target = $region9
  $region8: #{tpu_custom_call.1} parent=0 // pred_region
    _
  $region9: #{tpu_custom_call.1} parent=0 // pred_fallthru
    _
  // Predicated region
  $region10: #{tpu_custom_call.1} parent=0 // pred_check
    _
  $region11: #{tpu_custom_call.1} parent=0 // pred_check_branch
    %13 = sbr.rel (0) target = $region13
  $region12: #{tpu_custom_call.1} parent=0 // pred_region
    _
  $region13: #{tpu_custom_call.1} parent=0 // pred_fallthru
    _
  %p15 = scmp.eq.s32.totalorder 0, 0
  // Predicated region
  $region14: #{tpu_custom_call.1} parent=0 // pred_check
    %p16 = pneg %p15
  $region15: #{tpu_custom_call.1} parent=0 // pred_check_branch
    %18 = sbr.rel (%p16) target = $region17
  $region16: #{tpu_custom_call.1} parent=0 // pred_region
    %vm19 = vcmask 261120
    %20 = vst.msk [vmem:[#allocation2] sm:$0xff] %vm19, 0.0
    %21 = vst.msk [vmem:[#allocation2 + $0x8] sm:$0xff] %vm19, 0.0
    %22 = vst.msk [vmem:[#allocation2 + $0x10] sm:$0xff] %vm19, 0.0
    %23 = vst.msk [vmem:[#allocation2 + $0x18] sm:$0xff] %vm19, 0.0
    %24 = vst.msk [vmem:[#allocation2 + $0x20] sm:$0xff] %vm19, 0.0
    %25 = vst.msk [vmem:[#allocation2 + $0x28] sm:$0xff] %vm19, 0.0
    %26 = vst.msk [vmem:[#allocation2 + $0x30] sm:$0xff] %vm19, 0.0
    %27 = vst.msk [vmem:[#allocation2 + $0x38] sm:$0xff] %vm19, 0.0
    %28 = vst.msk [vmem:[#allocation2 + $0x40] sm:$0xff] %vm19, 0.0
    %29 = vst.msk [vmem:[#allocation2 + $0x48] sm:$0xff] %vm19, 0.0
    %30 = vst.msk [vmem:[#allocation2 + $0x50] sm:$0xff] %vm19, 0.0
    %31 = vst.msk [vmem:[#allocation2 + $0x58] sm:$0xff] %vm19, 0.0
    %32 = vst.msk [vmem:[#allocation2 + $0x60] sm:$0xff] %vm19, 0.0
    %33 = vst.msk [vmem:[#allocation2 + $0x68] sm:$0xff] %vm19, 0.0
    %34 = vst.msk [vmem:[#allocation2 + $0x70] sm:$0xff] %vm19, 0.0
    %35 = vst.msk [vmem:[#allocation2 + $0x78] sm:$0xff] %vm19, 0.0
  $region17: #{tpu_custom_call.1} parent=0 // pred_fallthru
    _
  %v36 = vld [vmem:[#allocation2] sm:$0xff]
  %v37 = vld [vmem:[#allocation2 + $0x8] sm:$0xff]
  %v38 = vld [vmem:[#allocation2 + $0x10] sm:$0xff]
  %v39 = vld [vmem:[#allocation2 + $0x18] sm:$0xff]
  %v40 = vld [vmem:[#allocation2 + $0x20] sm:$0xff]
  %v41 = vld [vmem:[#allocation2 + $0x28] sm:$0xff]
  %v42 = vld [vmem:[#allocation2 + $0x30] sm:$0xff]
  %v43 = vld [vmem:[#allocation2 + $0x38] sm:$0xff]
  %v44 = vld [vmem:[#allocation2 + $0x40] sm:$0xff]
  %v45 = vld [vmem:[#allocation2 + $0x48] sm:$0xff]
  %v46 = vld [vmem:[#allocation2 + $0x50] sm:$0xff]
  %v47 = vld [vmem:[#allocation2 + $0x58] sm:$0xff]
  %v48 = vld [vmem:[#allocation2 + $0x60] sm:$0xff]
  %v49 = vld [vmem:[#allocation2 + $0x68] sm:$0xff]
  %v50 = vld [vmem:[#allocation2 + $0x70] sm:$0xff]
  %v51 = vld [vmem:[#allocation2 + $0x78] sm:$0xff]
  %v52 = vld [vmem:[%s0] sm:$0xff]
  %v53 = vld [vmem:[%s0 + $0x8] sm:$0xff]
  %v54 = vld [vmem:[%s0 + $0x10] sm:$0xff]
  %v55 = vld [vmem:[%s0 + $0x18] sm:$0xff]
  %v56 = vld [vmem:[%s0 + $0x20] sm:$0xff]
  %v57 = vld [vmem:[%s0 + $0x28] sm:$0xff]
  %v58 = vld [vmem:[%s0 + $0x30] sm:$0xff]
  %v59 = vld [vmem:[%s0 + $0x38] sm:$0xff]
  %v60 = vld [vmem:[%s0 + $0x40] sm:$0xff]
  %v61 = vld [vmem:[%s0 + $0x48] sm:$0xff]
  %v62 = vld [vmem:[%s0 + $0x50] sm:$0xff]
  %v63 = vld [vmem:[%s0 + $0x58] sm:$0xff]
  %v64 = vld [vmem:[%s0 + $0x60] sm:$0xff]
  %v65 = vld [vmem:[%s0 + $0x68] sm:$0xff]
  %v66 = vld [vmem:[%s0 + $0x70] sm:$0xff]
  %v67 = vld [vmem:[%s0 + $0x78] sm:$0xff]
  %v68 = vld [vmem:[%s1] sm:$0xf]
  %v69 = vld [vmem:[%s1 + $0x4] sm:$0xf]
  %v70 = vld [vmem:[%s1 + $0x8] sm:$0xf]
  %v71 = vld [vmem:[%s1 + $0xc] sm:$0xf]
  %v72 = vld [vmem:[%s1 + $0x10] sm:$0xf]
  %v73 = vld [vmem:[%s1 + $0x14] sm:$0xf]
  %v74 = vld [vmem:[%s1 + $0x18] sm:$0xf]
  %v75 = vld [vmem:[%s1 + $0x1c] sm:$0xf]
  %v76 = vld [vmem:[%s1 + $0x20] sm:$0xf]
  %v77 = vld [vmem:[%s1 + $0x24] sm:$0xf]
  %v78 = vld [vmem:[%s1 + $0x28] sm:$0xf]
  %v79 = vld [vmem:[%s1 + $0x2c] sm:$0xf]
  %v80 = vld [vmem:[%s1 + $0x30] sm:$0xf]
  %v81 = vld [vmem:[%s1 + $0x34] sm:$0xf]
  %v82 = vld [vmem:[%s1 + $0x38] sm:$0xf]
  %v83 = vld [vmem:[%s1 + $0x3c] sm:$0xf]
  %v84 = vld [vmem:[%s1 + $0x40] sm:$0xf]
  %v85 = vld [vmem:[%s1 + $0x44] sm:$0xf]
  %v86 = vld [vmem:[%s1 + $0x48] sm:$0x3]
  %v103 = vunpack.c.l.b16 %v52
  %v104 = vunpack.c.h.b16 %v52
  %v105 = vunpack.c.l.b16 %v53
  %v106 = vunpack.c.h.b16 %v53
  %v107 = vunpack.c.l.b16 %v54
  %v108 = vunpack.c.h.b16 %v54
  %v109 = vunpack.c.l.b16 %v55
  %v110 = vunpack.c.h.b16 %v55
  %v111 = vunpack.c.l.b16 %v56
  %v112 = vunpack.c.h.b16 %v56
  %v113 = vunpack.c.l.b16 %v57
  %v114 = vunpack.c.h.b16 %v57
  %v115 = vunpack.c.l.b16 %v58
  %v116 = vunpack.c.h.b16 %v58
  %v117 = vunpack.c.l.b16 %v59
  %v118 = vunpack.c.h.b16 %v59
  %v119 = vunpack.c.l.b16 %v60
  %v120 = vunpack.c.h.b16 %v60
  %v121 = vunpack.c.l.b16 %v61
  %v122 = vunpack.c.h.b16 %v61
  %v123 = vunpack.c.l.b16 %v62
  %v124 = vunpack.c.h.b16 %v62
  %v125 = vunpack.c.l.b16 %v63
  %v126 = vunpack.c.h.b16 %v63
  %v127 = vunpack.c.l.b16 %v64
  %v128 = vunpack.c.h.b16 %v64
  %v129 = vunpack.c.l.b16 %v65
  %v130 = vunpack.c.h.b16 %v65
  %v131 = vunpack.c.l.b16 %v66
  %v132 = vunpack.c.h.b16 %v66
  %v133 = vunpack.c.l.b16 %v67
  %v134 = vunpack.c.h.b16 %v67
  %v135 = vpack.c.b16 %v105, %v103
  %v136 = vpack.c.b16 %v106, %v104
  %v137 = vpack.c.b16 %v109, %v107
  %v138 = vpack.c.b16 %v110, %v108
  %v139 = vpack.c.b16 %v113, %v111
  %v140 = vpack.c.b16 %v114, %v112
  %v141 = vpack.c.b16 %v117, %v115
  %v142 = vpack.c.b16 %v118, %v116
  %v143 = vpack.c.b16 %v121, %v119
  %v144 = vpack.c.b16 %v122, %v120
  %v145 = vpack.c.b16 %v125, %v123
  %v146 = vpack.c.b16 %v126, %v124
  %v147 = vpack.c.b16 %v129, %v127
  %v148 = vpack.c.b16 %v130, %v128
  %v149 = vpack.c.b16 %v133, %v131
  %v150 = vpack.c.b16 %v134, %v132
  %v178 = vunpack.c.l.b16 %v68
  %v179 = vunpack.c.l.b16 %v69
  %v180 = vunpack.c.l.b16 %v70
  %v181 = vunpack.c.l.b16 %v71
  %v182 = vunpack.c.l.b16 %v72
  %v183 = vunpack.c.l.b16 %v73
  %v184 = vunpack.c.l.b16 %v74
  %v185 = vunpack.c.l.b16 %v75
  %v186 = vunpack.c.l.b16 %v76
  %v187 = vunpack.c.l.b16 %v77
  %v188 = vunpack.c.l.b16 %v78
  %v189 = vunpack.c.l.b16 %v79
  %v190 = vunpack.c.l.b16 %v80
  %v191 = vunpack.c.l.b16 %v81
  %v192 = vunpack.c.l.b16 %v82
  %v193 = vunpack.c.l.b16 %v83
  %v194 = vunpack.c.l.b16 %v84
  %v195 = vunpack.c.l.b16 %v85
  %v196 = vunpack.c.l.b16 %v86
  %v197 = vpack.c.b16 %v179, %v178
  %v198 = vpack.c.b16 %v181, %v180
  %v199 = vpack.c.b16 %v183, %v182
  %v200 = vpack.c.b16 %v185, %v184
  %v201 = vpack.c.b16 %v187, %v186
  %v202 = vpack.c.b16 %v189, %v188
  %v203 = vpack.c.b16 %v191, %v190
  %v204 = vpack.c.b16 %v193, %v192
  %v205 = vpack.c.b16 %v195, %v194
  %v206 = vpack.c.b16 %v196, %v196
  %vm216 = vcmask 154624
  %v218 = vsel %vm216, %v136, 0
  %v221 = vsel %vm216, %v138, 0
  %v224 = vsel %vm216, %v140, 0
  %v227 = vsel %vm216, %v142, 0
  %v230 = vsel %vm216, %v144, 0
  %v233 = vsel %vm216, %v146, 0
  %v236 = vsel %vm216, %v148, 0
  %v239 = vsel %vm216, %v150, 0
  %vm241 = vcmask 1040384
  %vm242 = vcmask 1041408
  %v243 = vsel %vm241, 4294967295, 65535
  %v244 = vsel %vm242, %v243, 0
  %v246 = vand.u32 %v206, %v244
  %248 = vmatprep.subr.bf16.mxu0 0
  %249 = vmatpush1.bf16.msra.mxu0 %v204
  %250 = vmatprep.subr.bf16.mxu0 0
  %251 = vmatpush1.bf16.msra.mxu0 %v203
  %252 = vmatprep.subr.bf16.mxu0 0
  %253 = vmatpush1.bf16.msra.mxu0 %v202
  %254 = vmatprep.subr.bf16.mxu0 0
  %255 = vmatpush1.bf16.msra.mxu0 %v201
  %256 = vmatprep.subr.bf16.mxu0 0
  %257 = vmatpush1.bf16.msra.mxu0 %v200
  %258 = vmatprep.subr.bf16.mxu0 0
  %259 = vmatpush1.bf16.msra.mxu0 %v199
  %260 = vmatprep.subr.bf16.mxu0 0
  %261 = vmatpush1.bf16.msra.mxu0 %v198
  %262 = vmatprep.subr.bf16.mxu0 0
  %263 = vmatpush1.bf16.msra.mxu0 %v197
  %264 = vmatprep.subr.bf16.mxu0 0
  %265 = vmatpush2.bf16.msra.mxu0 0
  %266 = vmatprep.subr.bf16.mxu0 0
  %267 = vmatpush2.bf16.msra.mxu0 0
  %268 = vmatprep.subr.bf16.mxu0 0
  %269 = vmatpush2.bf16.msra.mxu0 0
  %270 = vmatprep.subr.bf16.mxu0 0
  %271 = vmatpush2.bf16.msra.mxu0 0
  %272 = vmatprep.subr.bf16.mxu0 0
  %273 = vmatpush2.bf16.msra.mxu0 0
  %274 = vmatprep.subr.bf16.mxu0 0
  %275 = vmatpush2.bf16.msra.mxu0 0
  %276 = vmatprep.subr.bf16.mxu0 0
  %277 = vmatpush2.bf16.msra.mxu0 %v246
  %278 = vmatprep.subr.bf16.mxu0 0
  %279 = vmatpush2.bf16.msra.mxu0 %v205
  %280 = vmatprep.mubr.bf16.mxu0 %v218
  %281 = vmatmul.mubr.bf16.gmra.mxu0 %v135
  %v282 = vpop.f32.mrf.mxu0
  %v283 = vadd.f32 0.0, %v282
  %v284 = vpop.f32.mrf.mxu0
  %v285 = vpop.f32.mrf.mxu0
  %v286 = vadd.f32 0.0, %v285
  %v287 = vpop.f32.mrf.mxu0
  %288 = vmatprep.mubr.bf16.mxu0 %v221
  %289 = vmatmul.mubr.bf16.gmra.mxu0 %v137
  %v290 = vpop.f32.mrf.mxu0
  %v291 = vadd.f32 0.0, %v290
  %v292 = vpop.f32.mrf.mxu0
  %v293 = vpop.f32.mrf.mxu0
  %v294 = vadd.f32 0.0, %v293
  %v295 = vpop.f32.mrf.mxu0
  %296 = vmatprep.mubr.bf16.mxu0 %v224
  %297 = vmatmul.mubr.bf16.gmra.mxu0 %v139
  %v298 = vpop.f32.mrf.mxu0
  %v299 = vadd.f32 0.0, %v298
  %v300 = vpop.f32.mrf.mxu0
  %v301 = vpop.f32.mrf.mxu0
  %v302 = vadd.f32 0.0, %v301
  %v303 = vpop.f32.mrf.mxu0
  %304 = vmatprep.mubr.bf16.mxu0 %v227
  %305 = vmatmul.mubr.bf16.gmra.mxu0 %v141
  %v306 = vpop.f32.mrf.mxu0
  %v307 = vadd.f32 0.0, %v306
  %v308 = vpop.f32.mrf.mxu0
  %v309 = vpop.f32.mrf.mxu0
  %v310 = vadd.f32 0.0, %v309
  %v311 = vpop.f32.mrf.mxu0
  %312 = vmatprep.mubr.bf16.mxu0 %v230
  %313 = vmatmul.mubr.bf16.gmra.mxu0 %v143
  %v314 = vpop.f32.mrf.mxu0
  %v315 = vadd.f32 0.0, %v314
  %v316 = vpop.f32.mrf.mxu0
  %v317 = vpop.f32.mrf.mxu0
  %v318 = vadd.f32 0.0, %v317
  %v319 = vpop.f32.mrf.mxu0
  %320 = vmatprep.mubr.bf16.mxu0 %v233
  %321 = vmatmul.mubr.bf16.gmra.mxu0 %v145
  %v322 = vpop.f32.mrf.mxu0
  %v323 = vadd.f32 0.0, %v322
  %v324 = vpop.f32.mrf.mxu0
  %v325 = vpop.f32.mrf.mxu0
  %v326 = vadd.f32 0.0, %v325
  %v327 = vpop.f32.mrf.mxu0
  %328 = vmatprep.mubr.bf16.mxu0 %v236
  %329 = vmatmul.mubr.bf16.gmra.mxu0 %v147
  %v330 = vpop.f32.mrf.mxu0
  %v331 = vadd.f32 0.0, %v330
  %v332 = vpop.f32.mrf.mxu0
  %v333 = vpop.f32.mrf.mxu0
  %v334 = vadd.f32 0.0, %v333
  %v335 = vpop.f32.mrf.mxu0
  %336 = vmatprep.mubr.bf16.mxu0 %v239
  %337 = vmatmul.mubr.bf16.gmra.mxu0 %v149
  %v338 = vpop.f32.mrf.mxu0
  %v339 = vadd.f32 0.0, %v338
  %v340 = vpop.f32.mrf.mxu0
  %v341 = vpop.f32.mrf.mxu0
  %v342 = vadd.f32 0.0, %v341
  %v343 = vpop.f32.mrf.mxu0
  %344 = vdwg.mxu0
  %v345 = vadd.f32 %v36, %v283
  %v346 = vadd.f32 %v37, %v286
  %v347 = vadd.f32 %v38, %v291
  %v348 = vadd.f32 %v39, %v294
  %v349 = vadd.f32 %v40, %v299
  %v350 = vadd.f32 %v41, %v302
  %v351 = vadd.f32 %v42, %v307
  %v352 = vadd.f32 %v43, %v310
  %v353 = vadd.f32 %v44, %v315
  %v354 = vadd.f32 %v45, %v318
  %v355 = vadd.f32 %v46, %v323
  %v356 = vadd.f32 %v47, %v326
  %v357 = vadd.f32 %v48, %v331
  %v358 = vadd.f32 %v49, %v334
  %v359 = vadd.f32 %v50, %v339
  %v360 = vadd.f32 %v51, %v342
  %vm361 = vcmask 261120
  %362 = vst.msk [vmem:[#allocation2] sm:$0xff] %vm361, %v345
  %363 = vst.msk [vmem:[#allocation2 + $0x8] sm:$0xff] %vm361, %v346
  %364 = vst.msk [vmem:[#allocation2 + $0x10] sm:$0xff] %vm361, %v347
  %365 = vst.msk [vmem:[#allocation2 + $0x18] sm:$0xff] %vm361, %v348
  %366 = vst.msk [vmem:[#allocation2 + $0x20] sm:$0xff] %vm361, %v349
  %367 = vst.msk [vmem:[#allocation2 + $0x28] sm:$0xff] %vm361, %v350
  %368 = vst.msk [vmem:[#allocation2 + $0x30] sm:$0xff] %vm361, %v351
  %369 = vst.msk [vmem:[#allocation2 + $0x38] sm:$0xff] %vm361, %v352
  %370 = vst.msk [vmem:[#allocation2 + $0x40] sm:$0xff] %vm361, %v353
  %371 = vst.msk [vmem:[#allocation2 + $0x48] sm:$0xff] %vm361, %v354
  %372 = vst.msk [vmem:[#allocation2 + $0x50] sm:$0xff] %vm361, %v355
  %373 = vst.msk [vmem:[#allocation2 + $0x58] sm:$0xff] %vm361, %v356
  %374 = vst.msk [vmem:[#allocation2 + $0x60] sm:$0xff] %vm361, %v357
  %375 = vst.msk [vmem:[#allocation2 + $0x68] sm:$0xff] %vm361, %v358
  %376 = vst.msk [vmem:[#allocation2 + $0x70] sm:$0xff] %vm361, %v359
  %377 = vst.msk [vmem:[#allocation2 + $0x78] sm:$0xff] %vm361, %v360
  // Predicated region
  $region18: #{tpu_custom_call.1} parent=0 // pred_check
    %p378 = pneg %p15
  $region19: #{tpu_custom_call.1} parent=0 // pred_check_branch
    %380 = sbr.rel (%p378) target = $region21
  $region20: #{tpu_custom_call.1} parent=0 // pred_region
    %v381 = vld [vmem:[#allocation2] sm:$0xff]
    %v382 = vld [vmem:[#allocation2 + $0x8] sm:$0xff]
    %v383 = vld [vmem:[#allocation2 + $0x10] sm:$0xff]
    %v384 = vld [vmem:[#allocation2 + $0x18] sm:$0xff]
    %v385 = vld [vmem:[#allocation2 + $0x20] sm:$0xff]
    %v386 = vld [vmem:[#allocation2 + $0x28] sm:$0xff]
    %v387 = vld [vmem:[#allocation2 + $0x30] sm:$0xff]
    %v388 = vld [vmem:[#allocation2 + $0x38] sm:$0xff]
    %v389 = vld [vmem:[#allocation2 + $0x40] sm:$0xff]
    %v390 = vld [vmem:[#allocation2 + $0x48] sm:$0xff]
    %v391 = vld [vmem:[#allocation2 + $0x50] sm:$0xff]
    %v392 = vld [vmem:[#allocation2 + $0x58] sm:$0xff]
    %v393 = vld [vmem:[#allocation2 + $0x60] sm:$0xff]
    %v394 = vld [vmem:[#allocation2 + $0x68] sm:$0xff]
    %v395 = vld [vmem:[#allocation2 + $0x70] sm:$0xff]
    %v396 = vld [vmem:[#allocation2 + $0x78] sm:$0xff]
    %v397 = vld [vmem:[%s2] sm:$0x1]
    %v399 = vlaneseq
    %v400 = vshrl.u32 %v399, 7
    %v401 = vsub.s32 0, %v400
    %v402 = vrot.slane %v397, %v401
    %v404 = vadd.f32 %v381, %v402
    %v405 = vadd.f32 %v382, %v402
    %v406 = vadd.f32 %v383, %v402
    %v407 = vadd.f32 %v384, %v402
    %v408 = vadd.f32 %v385, %v402
    %v409 = vadd.f32 %v386, %v402
    %v410 = vadd.f32 %v387, %v402
    %v411 = vadd.f32 %v388, %v402
    %v412 = vadd.f32 %v389, %v402
    %v413 = vadd.f32 %v390, %v402
    %v414 = vadd.f32 %v391, %v402
    %v415 = vadd.f32 %v392, %v402
    %v416 = vadd.f32 %v393, %v402
    %v417 = vadd.f32 %v394, %v402
    %v418 = vadd.f32 %v395, %v402
    %v419 = vadd.f32 %v396, %v402
    %v420 = vmax.f32 %v404, 0.0
    %v421 = vmax.f32 %v405, 0.0
    %v422 = vmax.f32 %v406, 0.0
    %v423 = vmax.f32 %v407, 0.0
    %v424 = vmax.f32 %v408, 0.0
    %v425 = vmax.f32 %v409, 0.0
    %v426 = vmax.f32 %v410, 0.0
    %v427 = vmax.f32 %v411, 0.0
    %v428 = vmax.f32 %v412, 0.0
    %v429 = vmax.f32 %v413, 0.0
    %v430 = vmax.f32 %v414, 0.0
    %v431 = vmax.f32 %v415, 0.0
    %v432 = vmax.f32 %v416, 0.0
    %v433 = vmax.f32 %v417, 0.0
    %v434 = vmax.f32 %v418, 0.0
    %v435 = vmax.f32 %v419, 0.0
    %v436 = vpack.c.bf16 %v421, %v420
    %v437 = vpack.c.bf16 %v423, %v422
    %v438 = vpack.c.bf16 %v425, %v424
    %v439 = vpack.c.bf16 %v427, %v426
    %v440 = vpack.c.bf16 %v429, %v428
    %v441 = vpack.c.bf16 %v431, %v430
    %v442 = vpack.c.bf16 %v433, %v432
    %v443 = vpack.c.bf16 %v435, %v434
    %v452 = vunpack.c.l.b16 %v436
    %v453 = vunpack.c.h.b16 %v436
    %v454 = vunpack.c.l.b16 %v437
    %v455 = vunpack.c.h.b16 %v437
    %v456 = vunpack.c.l.b16 %v438
    %v457 = vunpack.c.h.b16 %v438
    %v458 = vunpack.c.l.b16 %v439
    %v459 = vunpack.c.h.b16 %v439
    %v460 = vunpack.c.l.b16 %v440
    %v461 = vunpack.c.h.b16 %v440
    %v462 = vunpack.c.l.b16 %v441
    %v463 = vunpack.c.h.b16 %v441
    %v464 = vunpack.c.l.b16 %v442
    %v465 = vunpack.c.h.b16 %v442
    %v466 = vunpack.c.l.b16 %v443
    %v467 = vunpack.c.h.b16 %v443
    %v468 = vpack.c.b16 %v452, %v452
    %v469 = vpack.c.b16 %v453, %v453
    %v470 = vpack.c.b16 %v454, %v454
    %v471 = vpack.c.b16 %v455, %v455
    %v472 = vpack.c.b16 %v456, %v456
    %v473 = vpack.c.b16 %v457, %v457
    %v474 = vpack.c.b16 %v458, %v458
    %v475 = vpack.c.b16 %v459, %v459
    %v476 = vpack.c.b16 %v460, %v460
    %v477 = vpack.c.b16 %v461, %v461
    %v478 = vpack.c.b16 %v462, %v462
    %v479 = vpack.c.b16 %v463, %v463
    %v480 = vpack.c.b16 %v464, %v464
    %v481 = vpack.c.b16 %v465, %v465
    %v482 = vpack.c.b16 %v466, %v466
    %v483 = vpack.c.b16 %v467, %v467
    %vm500 = vcmask 257024
    %501 = vst.msk [vmem:[%s3] sm:$0xf] %vm500, %v468
    %502 = vst.msk [vmem:[%s3 + $0x4] sm:$0xf] %vm500, %v469
    %503 = vst.msk [vmem:[%s3 + $0x8] sm:$0xf] %vm500, %v470
    %504 = vst.msk [vmem:[%s3 + $0xc] sm:$0xf] %vm500, %v471
    %505 = vst.msk [vmem:[%s3 + $0x10] sm:$0xf] %vm500, %v472
    %506 = vst.msk [vmem:[%s3 + $0x14] sm:$0xf] %vm500, %v473
    %507 = vst.msk [vmem:[%s3 + $0x18] sm:$0xf] %vm500, %v474
    %508 = vst.msk [vmem:[%s3 + $0x1c] sm:$0xf] %vm500, %v475
    %509 = vst.msk [vmem:[%s3 + $0x20] sm:$0xf] %vm500, %v476
    %510 = vst.msk [vmem:[%s3 + $0x24] sm:$0xf] %vm500, %v477
    %511 = vst.msk [vmem:[%s3 + $0x28] sm:$0xf] %vm500, %v478
    %512 = vst.msk [vmem:[%s3 + $0x2c] sm:$0xf] %vm500, %v479
    %513 = vst.msk [vmem:[%s3 + $0x30] sm:$0xf] %vm500, %v480
    %514 = vst.msk [vmem:[%s3 + $0x34] sm:$0xf] %vm500, %v481
    %515 = vst.msk [vmem:[%s3 + $0x38] sm:$0xf] %vm500, %v482
    %516 = vst.msk [vmem:[%s3 + $0x3c] sm:$0xf] %vm500, %v483
  $region21: #{tpu_custom_call.1} parent=0 // pred_fallthru
    _
  // Predicated region
  $region22: #{tpu_custom_call.1} parent=0 // pred_check
    _
  $region23: #{tpu_custom_call.1} parent=0 // pred_check_branch
    %518 = sbr.rel (0) target = $region25
  $region24: #{tpu_custom_call.1} parent=0 // pred_region
    _
  $region25: #{tpu_custom_call.1} parent=0 // pred_fallthru
    _
  // Predicated region
  $region26: #{tpu_custom_call.1} parent=0 // pred_check
    _
  $region27: #{tpu_custom_call.1} parent=0 // pred_check_branch
    %520 = sbr.rel (0) target = $region29
  $region28: #{tpu_custom_call.1} parent=0 // pred_region
    _
  $region29: #{tpu_custom_call.1} parent=0 // pred_fallthru
    _

</llo_original>
